<compile_context>
chip_gen: v7x
topology: tpu7x:2x2x1
jax: 0.10.0
libtpu: 0.0.40
codegen_flags: <defaults>
</compile_context>

<pallas_src>
import functools
import math

import jax
import jax.numpy as jnp
from jax.experimental import pallas as pl
from jax.experimental.pallas import tpu as pltpu

_LANE = 128      # TPU lane width (last dim)
_SUBLANE = 8     # f32 sublane width (second-to-last dim)


def _round_up(n, m):
    return ((n + m - 1) // m) * m


def _rnn_cell_fc_kernel(x_ref, hx_ref, w_cat_ref, b_rnn_ref, w_fc_ref, b_fc_ref,
                        out_ref, hx_new_ref):
    """Fused RNNCell(tanh) + Linear step, everything lane/sublane padded.

    x_ref      : (B_pad, IN_pad)          x in lanes [0:size_in], zeros elsewhere
    hx_ref     : (B_pad, H_pad)           hx in lanes [0:size_middle], zeros elsewhere
    w_cat_ref  : (IN_pad + H_pad, H_pad)  rows [0:size_in] = W_ih^T,
                                          rows [IN_pad:IN_pad+size_middle] = W_hh^T
    b_rnn_ref  : (1, H_pad)               b_ih + b_hh (padded with zeros)
    w_fc_ref   : (H_pad, O_pad)           W_fc^T in [0:size_middle, 0:size_out]
    b_fc_ref   : (1, O_pad)
    out_ref    : (B_pad, O_pad)
    hx_new_ref : (B_pad, H_pad)           aliased with hx input (in-place update)
    """
    # Lane-aligned concat [x | hx] -> single fused matmul on the MXU.
    xh = jnp.concatenate([x_ref[...], hx_ref[...]], axis=-1)      # (B_pad, IN_pad+H_pad)
    pre = (jnp.dot(xh, w_cat_ref[...], preferred_element_type=jnp.float32)
           + b_rnn_ref[...])
    h_new = jnp.tanh(pre)            # padded lanes: tanh(0) = 0, so the carry stays clean
    hx_new_ref[...] = h_new

    out_ref[...] = (jnp.dot(h_new, w_fc_ref[...], preferred_element_type=jnp.float32)
                    + b_fc_ref[...])


def prepare_params(w_ih, w_hh, b_ih, b_hh, w_fc, b_fc):
    """One-time parameter prep: transpose, stack, fold biases, zero-pad to 128 lanes.

    Weights come in PyTorch (out_features, in_features) layout.
    Returns (w_cat, b_rnn, w_fc_p, b_fc_p) ready for rnn_model_step.
    """
    size_middle, size_in = w_ih.shape
    size_out = w_fc.shape[0]
    in_pad = _round_up(size_in, _LANE)
    h_pad = _round_up(size_middle, _LANE)
    o_pad = _round_up(size_out, _LANE)

    w_cat = jnp.zeros((in_pad + h_pad, h_pad), jnp.float32)
    w_cat = w_cat.at[:size_in, :size_middle].set(jnp.asarray(w_ih, jnp.float32).T)
    w_cat = w_cat.at[in_pad:in_pad + size_middle, :size_middle].set(
        jnp.asarray(w_hh, jnp.float32).T)

    b_rnn = jnp.zeros((1, h_pad), jnp.float32)
    b_rnn = b_rnn.at[0, :size_middle].set(
        jnp.asarray(b_ih, jnp.float32) + jnp.asarray(b_hh, jnp.float32))

    w_fc_p = jnp.zeros((h_pad, o_pad), jnp.float32)
    w_fc_p = w_fc_p.at[:size_middle, :size_out].set(jnp.asarray(w_fc, jnp.float32).T)

    b_fc_p = jnp.zeros((1, o_pad), jnp.float32)
    b_fc_p = b_fc_p.at[0, :size_out].set(jnp.asarray(b_fc, jnp.float32))

    return w_cat, b_rnn, w_fc_p, b_fc_p


def init_hidden(batch_size, size_middle):
    """Padded zero hidden state carried between steps: (B_pad, H_pad)."""
    return jnp.zeros(
        (_round_up(batch_size, _SUBLANE), _round_up(size_middle, _LANE)), jnp.float32)


@functools.partial(jax.jit, static_argnames=("size_out",))
def rnn_model_step(x, hx_pad, w_cat, b_rnn, w_fc_p, b_fc_p, *, size_out):
    """One RNN_Model.forward step.

    x      : (B, size_in)    raw input batch
    hx_pad : (B_pad, H_pad)  padded carried hidden state (from init_hidden or a
                             previous step's second return value)
    Returns (out, hx_pad_new) with out: (B, size_out), hx_pad_new: (B_pad, H_pad).
    """
    B, size_in = x.shape
    B_pad, h_pad = hx_pad.shape
    in_pad = _round_up(size_in, _LANE)
    o_pad = w_fc_p.shape[1]

    # Only per-step prep: zero-pad x into a lane-dense (B_pad, in_pad) slab.
    x_p = jnp.zeros((B_pad, in_pad), jnp.float32).at[:B, :size_in].set(
        x.astype(jnp.float32))

    vmem = pl.BlockSpec(memory_space=pltpu.MemorySpace.VMEM)
    out_pad, hx_pad_new = pl.pallas_call(
        _rnn_cell_fc_kernel,
        out_shape=(
            jax.ShapeDtypeStruct((B_pad, o_pad), jnp.float32),
            jax.ShapeDtypeStruct((B_pad, h_pad), jnp.float32),
        ),
        in_specs=[vmem] * 6,
        out_specs=(vmem, vmem),
        input_output_aliases={1: 1},   # update the hidden state in place
    )(x_p, hx_pad, w_cat, b_rnn, w_fc_p, b_fc_p)

    return out_pad[:B, :size_out], hx_pad_new


def init_params(key, size_in=16, size_middle=32, size_out=6):
    """Deterministic parameter init mirroring PyTorch's default uniform init."""
    k = 1.0 / math.sqrt(size_middle)
    keys = jax.random.split(key, 6)
    w_ih = jax.random.uniform(keys[0], (size_middle, size_in), jnp.float32, -k, k)
    w_hh = jax.random.uniform(keys[1], (size_middle, size_middle), jnp.float32, -k, k)
    b_ih = jax.random.uniform(keys[2], (size_middle,), jnp.float32, -k, k)
    b_hh = jax.random.uniform(keys[3], (size_middle,), jnp.float32, -k, k)
    w_fc = jax.random.uniform(keys[4], (size_out, size_middle), jnp.float32, -k, k)
    b_fc = jax.random.uniform(keys[5], (size_out,), jnp.float32, -k, k)
    return w_ih, w_hh, b_ih, b_hh, w_fc, b_fc


if __name__ == "__main__":
    size_in, size_middle, size_out, batch = 16, 32, 6, 10

    key = jax.random.PRNGKey(0)
    k_x, k_p = jax.random.split(key)
    x = jax.random.normal(k_x, (batch, size_in), jnp.float32)
    raw = init_params(k_p, size_in, size_middle, size_out)
    w_ih, w_hh, b_ih, b_hh, w_fc, b_fc = raw

    # One-time parameter prep (transpose / stack / fold biases / pad).
    params = prepare_params(*raw)
    hx_pad = init_hidden(batch, size_middle)            # self.hx = zeros(...)

    # Step 1.
    out, hx_pad_new = rnn_model_step(x, hx_pad, *params, size_out=size_out)
    jax.block_until_ready((out, hx_pad_new))

    # Pure-JAX reference of the same math (eval-mode dropout == identity).
    hx0 = jnp.zeros((batch, size_middle), jnp.float32)
    h_ref = jnp.tanh(x @ w_ih.T + b_ih + hx0 @ w_hh.T + b_hh)
    out_ref = h_ref @ w_fc.T + b_fc
    hx_new = hx_pad_new[:batch, :size_middle]

    assert out.shape == (batch, size_out)
    assert jnp.allclose(out, out_ref, atol=1e-5), "output mismatch (step 1)"
    assert jnp.allclose(hx_new, h_ref, atol=1e-5), "hidden state mismatch (step 1)"
    # Padded lanes of the carried state must stay exactly zero.
    assert jnp.allclose(hx_pad_new[:batch, size_middle:], 0.0), "padding not clean"

    # Step 2: exercise the carried (aliased, padded) hidden state.
    out2, hx_pad_2 = rnn_model_step(x, hx_pad_new, *params, size_out=size_out)
    jax.block_until_ready((out2, hx_pad_2))
    h_ref2 = jnp.tanh(x @ w_ih.T + b_ih + h_ref @ w_hh.T + b_hh)
    out_ref2 = h_ref2 @ w_fc.T + b_fc
    assert jnp.allclose(out2, out_ref2, atol=1e-4), "output mismatch (step 2)"
    assert jnp.allclose(hx_pad_2[:batch, :size_middle], h_ref2, atol=1e-4), \
        "hidden state mismatch (step 2)"

    print("KERNEL_OK")
</pallas_src>

<mosaic_0001>
module attributes {stable_mosaic.version = 11 : i64} {
  func.func @_rnn_cell_fc_kernel(%arg0: memref<16x128xf32, #tpu.memory_space<vmem>>, %arg1: memref<16x128xf32, #tpu.memory_space<vmem>>, %arg2: memref<256x128xf32, #tpu.memory_space<vmem>>, %arg3: memref<1x128xf32, #tpu.memory_space<vmem>>, %arg4: memref<128x128xf32, #tpu.memory_space<vmem>>, %arg5: memref<1x128xf32, #tpu.memory_space<vmem>>, %arg6: memref<16x128xf32, #tpu.memory_space<vmem>>, %arg7: memref<16x128xf32, #tpu.memory_space<vmem>>) attributes {dimension_semantics = [], scalar_prefetch = 0 : i64, scratch_operands = 0 : i64, tpu.core_type = #tpu.core_type<tc>} {
    %c0 = arith.constant 0 : index
    %c0_0 = arith.constant 0 : index
    %0 = vector.load %arg0[%c0, %c0_0] : memref<16x128xf32, #tpu.memory_space<vmem>>, vector<16x128xf32>
    %c0_1 = arith.constant 0 : index
    %c0_2 = arith.constant 0 : index
    %1 = vector.load %arg1[%c0_1, %c0_2] : memref<16x128xf32, #tpu.memory_space<vmem>>, vector<16x128xf32>
    %2 = tpu.concatenate %0, %1 in 1 : vector<16x128xf32>, vector<16x128xf32> -> vector<16x256xf32>
    %c0_3 = arith.constant 0 : index
    %c0_4 = arith.constant 0 : index
    %3 = vector.load %arg2[%c0_3, %c0_4] : memref<256x128xf32, #tpu.memory_space<vmem>>, vector<256x128xf32>
    %cst = arith.constant dense<0.000000e+00> : vector<16x128xf32>
    %4 = tpu.matmul %2, %3, %cst {dimension_numbers = #tpu.dot_dimension_numbers<[1], [0], [0], [1], [0, 0, 1, 1], [], []>} : vector<16x256xf32>, vector<256x128xf32>, vector<16x128xf32> -> vector<16x128xf32>
    %c0_5 = arith.constant 0 : index
    %c0_6 = arith.constant 0 : index
    %5 = vector.load %arg3[%c0_5, %c0_6] : memref<1x128xf32, #tpu.memory_space<vmem>>, vector<1x128xf32>
    %6 = vector.broadcast %5 : vector<1x128xf32> to vector<16x128xf32>
    %7 = arith.addf %4, %6 : vector<16x128xf32>
    %8 = math.tanh %7 : vector<16x128xf32>
    %c0_7 = arith.constant 0 : index
    %c0_8 = arith.constant 0 : index
    %9 = vector.load %arg7[%c0_7, %c0_8] : memref<16x128xf32, #tpu.memory_space<vmem>>, vector<16x128xf32>
    tpu.vector_store %arg7[%c0_7, %c0_8], %8 {strides = array<i32>} : memref<16x128xf32, #tpu.memory_space<vmem>>, vector<16x128xf32>,
    %c0_9 = arith.constant 0 : index
    %c0_10 = arith.constant 0 : index
    %10 = vector.load %arg4[%c0_9, %c0_10] : memref<128x128xf32, #tpu.memory_space<vmem>>, vector<128x128xf32>
    %cst_11 = arith.constant dense<0.000000e+00> : vector<16x128xf32>
    %11 = tpu.matmul %8, %10, %cst_11 {dimension_numbers = #tpu.dot_dimension_numbers<[1], [0], [0], [1], [0, 0, 1, 1], [], []>} : vector<16x128xf32>, vector<128x128xf32>, vector<16x128xf32> -> vector<16x128xf32>
    %c0_12 = arith.constant 0 : index
    %c0_13 = arith.constant 0 : index
    %12 = vector.load %arg5[%c0_12, %c0_13] : memref<1x128xf32, #tpu.memory_space<vmem>>, vector<1x128xf32>
    %13 = vector.broadcast %12 : vector<1x128xf32> to vector<16x128xf32>
    %14 = arith.addf %11, %13 : vector<16x128xf32>
    %c0_14 = arith.constant 0 : index
    %c0_15 = arith.constant 0 : index
    %15 = vector.load %arg6[%c0_14, %c0_15] : memref<16x128xf32, #tpu.memory_space<vmem>>, vector<16x128xf32>
    tpu.vector_store %arg6[%c0_14, %c0_15], %14 {strides = array<i32>} : memref<16x128xf32, #tpu.memory_space<vmem>>, vector<16x128xf32>,
    return
  }
}

</mosaic_0001>

<llo_original>
// kernel: rnn_model_step.1
$region0: #{rnn_model_step.1}
  #allocation0 [shape = 'u32[]', space=smem, size = 0x4, offset = 0x4, fixed_abs, tag = 'smem constant byte address 0x4 - core index']
  #allocation1 [shape = 'u32[144,128]{1,0:T(1,128)}', space=vmem, size = 0x12000, scoped, tag = 'internal scratch']
  %s0 = inlined_call_operand.vmem [shape: f32[16,128], index: 0, kind: input, shape index: {}]
  %s1 = inlined_call_operand.vmem [shape: f32[16,128], index: 1, kind: input, shape index: {}, may-alias: {1,7}]
  %s2 = inlined_call_operand.hbm [shape: f32[256,128], index: 2, kind: input, shape index: {}]
  %s3 = inlined_call_operand.vmem [shape: f32[1,128], index: 3, kind: input, shape index: {}]
  %s4 = inlined_call_operand.hbm [shape: f32[128,128], index: 4, kind: input, shape index: {}]
  %s5 = inlined_call_operand.vmem [shape: f32[1,128], index: 5, kind: input, shape index: {}]
  %s6 = inlined_call_operand.vmem [shape: f32[16,128], index: 6, kind: output, shape index: {0}]
  %s7 = inlined_call_operand.vmem [shape: f32[16,128], index: 7, kind: output, shape index: {1}, may-alias: {1,7}]
  %8 = xla_tuple %s6, %s7
  %s9 = sld [smem:[#allocation0]]
  $region50: #{rnn_model_step.1} parent=0
    _
  %s11 = ssub.s32 1, %s9
  %s12 = scalar_select 0, %s11, %s9
  $region1: #{rnn_model_step.1} parent=0
    #allocation2 [shape = 'u8[131072]{0}', space=vmem, size = 0x20000, scoped, tag = 'input window, operand 2, single buffered']
    #allocation3 [shape = 's32[1]{0}', space=sflag, size = 0x4, scoped, tag = 'scoped memory for rnn_model_step.1']
    #allocation4 [shape = 'u8[65536]{0}', space=vmem, size = 0x10000, scoped, tag = 'input window, operand 4, single buffered']
    #allocation5 [shape = 's32[1]{0}', space=sflag, size = 0x4, scoped, tag = 'scoped memory for rnn_model_step.1']
    %13 = vsyncpa [#allocation3], 0
    %14 = vsyncpa [#allocation5], 0
    // Predicated region
    $region2: #{rnn_model_step.1} parent=1 // pred_check
      _
    $region3: #{rnn_model_step.1} parent=1 // pred_check_branch
      %16 = sbr.rel (0) target = $region5
    $region4: #{rnn_model_step.1} parent=1 // pred_region
      _
    $region5: #{rnn_model_step.1} parent=1 // pred_fallthru
      _
    // Predicated region
    $region6: #{rnn_model_step.1} parent=1 // pred_check
      _
    $region7: #{rnn_model_step.1} parent=1 // pred_check_branch
      %18 = sbr.rel (0) target = $region9
    $region8: #{rnn_model_step.1} parent=1 // pred_region
      _
    $region9: #{rnn_model_step.1} parent=1 // pred_fallthru
      _
    // Predicated region
    $region10: #{rnn_model_step.1} parent=1 // pred_check
      _
    $region11: #{rnn_model_step.1} parent=1 // pred_check_branch
      %20 = sbr.rel (0) target = $region13
    $region12: #{rnn_model_step.1} parent=1 // pred_region
      %s22 = ssub.s32 4096, 4096
      %23 = vsyncadd [#allocation3], %s22
      %s24 = sshll.u32 [#allocation2], 4
      %s25 = int_to_ptr.vmem [resolvable:$true] %s24
      %30 = dma.hbm_to_vmem [thread:$0]  %s2, 4096, %s25, [#allocation3], 128, 128, 8
    $region13: #{rnn_model_step.1} parent=1 // pred_fallthru
      _
    // Predicated region
    $region14: #{rnn_model_step.1} parent=1 // pred_check
      _
    $region15: #{rnn_model_step.1} parent=1 // pred_check_branch
      %32 = sbr.rel (0) target = $region17
    $region16: #{rnn_model_step.1} parent=1 // pred_region
      _
    $region17: #{rnn_model_step.1} parent=1 // pred_fallthru
      _
    // Predicated region
    $region18: #{rnn_model_step.1} parent=1 // pred_check
      _
    $region19: #{rnn_model_step.1} parent=1 // pred_check_branch
      %34 = sbr.rel (0) target = $region21
    $region20: #{rnn_model_step.1} parent=1 // pred_region
      %s36 = ssub.s32 2048, 2048
      %37 = vsyncadd [#allocation5], %s36
      %s38 = sshll.u32 [#allocation4], 4
      %s39 = int_to_ptr.vmem [resolvable:$true] %s38
      %44 = dma.hbm_to_vmem [thread:$0]  %s4, 2048, %s39, [#allocation5], 128, 128, 8
    $region21: #{rnn_model_step.1} parent=1 // pred_fallthru
      _
    // Predicated region
    $region22: #{rnn_model_step.1} parent=1 // pred_check
      _
    $region23: #{rnn_model_step.1} parent=1 // pred_check_branch
      %46 = sbr.rel (0) target = $region25
    $region24: #{rnn_model_step.1} parent=1 // pred_region
      _
    $region25: #{rnn_model_step.1} parent=1 // pred_fallthru
      _
    // Predicated region
    $region26: #{rnn_model_step.1} parent=1 // pred_check
      _
    $region27: #{rnn_model_step.1} parent=1 // pred_check_branch
      %48 = sbr.rel (0) target = $region29
    $region28: #{rnn_model_step.1} parent=1 // pred_region
      %49 = dma.done [#allocation3], 4096
    $region29: #{rnn_model_step.1} parent=1 // pred_fallthru
      _
    // Predicated region
    $region30: #{rnn_model_step.1} parent=1 // pred_check
      _
    $region31: #{rnn_model_step.1} parent=1 // pred_check_branch
      %51 = sbr.rel (0) target = $region33
    $region32: #{rnn_model_step.1} parent=1 // pred_region
      %52 = dma.done [#allocation5], 2048
    $region33: #{rnn_model_step.1} parent=1 // pred_fallthru
      _
    %v53 = vld [vmem:[%s0] sm:$0xff]
    %v54 = vld [vmem:[%s0 + $0x8] sm:$0xff]
    %v55 = vld [vmem:[%s1] sm:$0xff]
    %v56 = vld [vmem:[%s1 + $0x8] sm:$0xff]
    %v57 = vld [vmem:[#allocation2] sm:$0xff]
    %v58 = vld [vmem:[#allocation2 + $0x8] sm:$0xff]
    %v59 = vld [vmem:[#allocation2 + $0x10] sm:$0xff]
    %v60 = vld [vmem:[#allocation2 + $0x18] sm:$0xff]
    %v61 = vld [vmem:[#allocation2 + $0x20] sm:$0xff]
    %v62 = vld [vmem:[#allocation2 + $0x28] sm:$0xff]
    %v63 = vld [vmem:[#allocation2 + $0x30] sm:$0xff]
    %v64 = vld [vmem:[#allocation2 + $0x38] sm:$0xff]
    %v65 = vld [vmem:[#allocation2 + $0x40] sm:$0xff]
    %v66 = vld [vmem:[#allocation2 + $0x48] sm:$0xff]
    %v67 = vld [vmem:[#allocation2 + $0x50] sm:$0xff]
    %v68 = vld [vmem:[#allocation2 + $0x58] sm:$0xff]
    %v69 = vld [vmem:[#allocation2 + $0x60] sm:$0xff]
    %v70 = vld [vmem:[#allocation2 + $0x68] sm:$0xff]
    %v71 = vld [vmem:[#allocation2 + $0x70] sm:$0xff]
    %v72 = vld [vmem:[#allocation2 + $0x78] sm:$0xff]
    %v73 = vld [vmem:[#allocation2 + $0x80] sm:$0xff]
    %v74 = vld [vmem:[#allocation2 + $0x88] sm:$0xff]
    %v75 = vld [vmem:[#allocation2 + $0x90] sm:$0xff]
    %v76 = vld [vmem:[#allocation2 + $0x98] sm:$0xff]
    %v77 = vld [vmem:[#allocation2 + $0xa0] sm:$0xff]
    %v78 = vld [vmem:[#allocation2 + $0xa8] sm:$0xff]
    %v79 = vld [vmem:[#allocation2 + $0xb0] sm:$0xff]
    %v80 = vld [vmem:[#allocation2 + $0xb8] sm:$0xff]
    %v81 = vld [vmem:[#allocation2 + $0xc0] sm:$0xff]
    %v82 = vld [vmem:[#allocation2 + $0xc8] sm:$0xff]
    %v83 = vld [vmem:[#allocation2 + $0xd0] sm:$0xff]
    %v84 = vld [vmem:[#allocation2 + $0xd8] sm:$0xff]
    %v85 = vld [vmem:[#allocation2 + $0xe0] sm:$0xff]
    %v86 = vld [vmem:[#allocation2 + $0xe8] sm:$0xff]
    %v87 = vld [vmem:[#allocation2 + $0xf0] sm:$0xff]
    %v88 = vld [vmem:[#allocation2 + $0xf8] sm:$0xff]
    %v89 = vld [vmem:[%s3] sm:$0x1]
    %v91 = vlaneseq
    %v92 = vshrl.u32 %v91, 7
    %v93 = vsub.s32 0, %v92
    %v94 = vrot.slane %v89, %v93
    %96 = vmatprep.subr.mxu0 0.0
    %97 = vmatpush1.msra.mxu0 %v57
    %98 = vmatprep.subr.mxu0 0.0
    %99 = vmatpush1.msra.mxu0 %v58
    %100 = vmatprep.subr.mxu0 0.0
    %101 = vmatpush1.msra.mxu0 %v59
    %102 = vmatprep.subr.mxu0 0.0
    %103 = vmatpush1.msra.mxu0 %v60
    %104 = vmatprep.subr.mxu0 0.0
    %105 = vmatpush1.msra.mxu0 %v61
    %106 = vmatprep.subr.mxu0 0.0
    %107 = vmatpush1.msra.mxu0 %v62
    %108 = vmatprep.subr.mxu0 0.0
    %109 = vmatpush1.msra.mxu0 %v63
    %110 = vmatprep.subr.mxu0 0.0
    %111 = vmatpush1.msra.mxu0 %v64
    %112 = vmatprep.subr.mxu0 0.0
    %113 = vmatpush1.msra.mxu0 %v65
    %114 = vmatprep.subr.mxu0 0.0
    %115 = vmatpush1.msra.mxu0 %v66
    %116 = vmatprep.subr.mxu0 0.0
    %117 = vmatpush1.msra.mxu0 %v67
    %118 = vmatprep.subr.mxu0 0.0
    %119 = vmatpush1.msra.mxu0 %v68
    %120 = vmatprep.subr.mxu0 0.0
    %121 = vmatpush1.msra.mxu0 %v69
    %122 = vmatprep.subr.mxu0 0.0
    %123 = vmatpush1.msra.mxu0 %v70
    %124 = vmatprep.subr.mxu0 0.0
    %125 = vmatpush1.msra.mxu0 %v71
    %126 = vmatprep.subr.mxu0 0.0
    %127 = vmatpush1.msra.mxu0 %v72
    %128 = vmatprep.subr.mxu0 0.0
    %129 = vmatpush1.msra.mxu0 %v73
    %130 = vmatprep.subr.mxu0 0.0
    %131 = vmatpush1.msra.mxu0 %v74
    %132 = vmatprep.subr.mxu0 0.0
    %133 = vmatpush1.msra.mxu0 %v75
    %134 = vmatprep.subr.mxu0 0.0
    %135 = vmatpush1.msra.mxu0 %v76
    %136 = vmatprep.subr.mxu0 0.0
    %137 = vmatpush1.msra.mxu0 %v77
    %138 = vmatprep.subr.mxu0 0.0
    %139 = vmatpush1.msra.mxu0 %v78
    %140 = vmatprep.subr.mxu0 0.0
    %141 = vmatpush1.msra.mxu0 %v79
    %142 = vmatprep.subr.mxu0 0.0
    %143 = vmatpush1.msra.mxu0 %v80
    %144 = vmatprep.subr.mxu0 0.0
    %145 = vmatpush1.msra.mxu0 %v81
    %146 = vmatprep.subr.mxu0 0.0
    %147 = vmatpush1.msra.mxu0 %v82
    %148 = vmatprep.subr.mxu0 0.0
    %149 = vmatpush1.msra.mxu0 %v83
    %150 = vmatprep.subr.mxu0 0.0
    %151 = vmatpush1.msra.mxu0 %v84
    %152 = vmatprep.subr.mxu0 0.0
    %153 = vmatpush1.msra.mxu0 %v85
    %154 = vmatprep.subr.mxu0 0.0
    %155 = vmatpush1.msra.mxu0 %v86
    %156 = vmatprep.subr.mxu0 0.0
    %157 = vmatpush1.msra.mxu0 %v87
    %158 = vmatprep.subr.mxu0 0.0
    %159 = vmatpush1.msra.mxu0 %v88
    %160 = vmatprep.mubr.f32.mxu0 %v55
    %161 = vmatmul.mubr.f32.gmra.mrb[0].mxu0 %v53
    %v162 = vpop.f32.mrb[0].mxu0
    %v163 = vadd.f32 %v94, %v162
    %v164 = vpop.f32.mrb[0].mxu0
    %165 = vmatprep.mubr.f32.mxu0 %v56
    %166 = vmatmul.mubr.f32.gmra.mrb[0].mxu0 %v54
    %v167 = vpop.f32.mrb[0].mxu0
    %v168 = vadd.f32 %v94, %v167
    %v169 = vpop.f32.mrb[0].mxu0
    %170 = vdwg.mxu0
    %v171 = vtanh.pop %v163
    %v172 = vtanh.pop %v168
    %173 = vst [vmem:[%s7] sm:$0xff] %v171
    %174 = vst [vmem:[%s7 + $0x8] sm:$0xff] %v172
    %v175 = vld [vmem:[#allocation4] sm:$0xff]
    %v176 = vld [vmem:[#allocation4 + $0x8] sm:$0xff]
    %v177 = vld [vmem:[#allocation4 + $0x10] sm:$0xff]
    %v178 = vld [vmem:[#allocation4 + $0x18] sm:$0xff]
    %v179 = vld [vmem:[#allocation4 + $0x20] sm:$0xff]
    %v180 = vld [vmem:[#allocation4 + $0x28] sm:$0xff]
    %v181 = vld [vmem:[#allocation4 + $0x30] sm:$0xff]
    %v182 = vld [vmem:[#allocation4 + $0x38] sm:$0xff]
    %v183 = vld [vmem:[#allocation4 + $0x40] sm:$0xff]
    %v184 = vld [vmem:[#allocation4 + $0x48] sm:$0xff]
    %v185 = vld [vmem:[#allocation4 + $0x50] sm:$0xff]
    %v186 = vld [vmem:[#allocation4 + $0x58] sm:$0xff]
    %v187 = vld [vmem:[#allocation4 + $0x60] sm:$0xff]
    %v188 = vld [vmem:[#allocation4 + $0x68] sm:$0xff]
    %v189 = vld [vmem:[#allocation4 + $0x70] sm:$0xff]
    %v190 = vld [vmem:[#allocation4 + $0x78] sm:$0xff]
    %v191 = vld [vmem:[%s5] sm:$0x1]
    %v193 = vlaneseq
    %v194 = vshrl.u32 %v193, 7
    %v195 = vsub.s32 0, %v194
    %v196 = vrot.slane %v191, %v195
    %198 = vmatprep.subr.mxu0 0.0
    %199 = vmatpush1.msra.mxu0 %v175
    %200 = vmatprep.subr.mxu0 0.0
    %201 = vmatpush1.msra.mxu0 %v176
    %202 = vmatprep.subr.mxu0 0.0
    %203 = vmatpush1.msra.mxu0 %v177
    %204 = vmatprep.subr.mxu0 0.0
    %205 = vmatpush1.msra.mxu0 %v178
    %206 = vmatprep.subr.mxu0 0.0
    %207 = vmatpush1.msra.mxu0 %v179
    %208 = vmatprep.subr.mxu0 0.0
    %209 = vmatpush1.msra.mxu0 %v180
    %210 = vmatprep.subr.mxu0 0.0
    %211 = vmatpush1.msra.mxu0 %v181
    %212 = vmatprep.subr.mxu0 0.0
    %213 = vmatpush1.msra.mxu0 %v182
    %214 = vmatprep.subr.mxu0 0.0
    %215 = vmatpush1.msra.mxu0 %v183
    %216 = vmatprep.subr.mxu0 0.0
    %217 = vmatpush1.msra.mxu0 %v184
    %218 = vmatprep.subr.mxu0 0.0
    %219 = vmatpush1.msra.mxu0 %v185
    %220 = vmatprep.subr.mxu0 0.0
    %221 = vmatpush1.msra.mxu0 %v186
    %222 = vmatprep.subr.mxu0 0.0
    %223 = vmatpush1.msra.mxu0 %v187
    %224 = vmatprep.subr.mxu0 0.0
    %225 = vmatpush1.msra.mxu0 %v188
    %226 = vmatprep.subr.mxu0 0.0
    %227 = vmatpush1.msra.mxu0 %v189
    %228 = vmatprep.subr.mxu0 0.0
    %229 = vmatpush1.msra.mxu0 %v190
    %230 = vmatprep.subr.mxu0 0.0
    %231 = vmatpush1.msra.mxu0 0.0
    %232 = vmatprep.subr.mxu0 0.0
    %233 = vmatpush1.msra.mxu0 0.0
    %234 = vmatprep.subr.mxu0 0.0
    %235 = vmatpush1.msra.mxu0 0.0
    %236 = vmatprep.subr.mxu0 0.0
    %237 = vmatpush1.msra.mxu0 0.0
    %238 = vmatprep.subr.mxu0 0.0
    %239 = vmatpush1.msra.mxu0 0.0
    %240 = vmatprep.subr.mxu0 0.0
    %241 = vmatpush1.msra.mxu0 0.0
    %242 = vmatprep.subr.mxu0 0.0
    %243 = vmatpush1.msra.mxu0 0.0
    %244 = vmatprep.subr.mxu0 0.0
    %245 = vmatpush1.msra.mxu0 0.0
    %246 = vmatprep.subr.mxu0 0.0
    %247 = vmatpush1.msra.mxu0 0.0
    %248 = vmatprep.subr.mxu0 0.0
    %249 = vmatpush1.msra.mxu0 0.0
    %250 = vmatprep.subr.mxu0 0.0
    %251 = vmatpush1.msra.mxu0 0.0
    %252 = vmatprep.subr.mxu0 0.0
    %253 = vmatpush1.msra.mxu0 0.0
    %254 = vmatprep.subr.mxu0 0.0
    %255 = vmatpush1.msra.mxu0 0.0
    %256 = vmatprep.subr.mxu0 0.0
    %257 = vmatpush1.msra.mxu0 0.0
    %258 = vmatprep.subr.mxu0 0.0
    %259 = vmatpush1.msra.mxu0 0.0
    %260 = vmatprep.subr.mxu0 0.0
    %261 = vmatpush1.msra.mxu0 0.0
    %262 = vmatprep.mubr.f32.mxu0 0.0
    %263 = vmatmul.mubr.f32.gmra.mrb[0].mxu0 %v171
    %v264 = vpop.f32.mrb[0].mxu0
    %v265 = vadd.f32 %v196, %v264
    %v266 = vpop.f32.mrb[0].mxu0
    %267 = vmatprep.mubr.f32.mxu0 0.0
    %268 = vmatmul.mubr.f32.gmra.mrb[0].mxu0 %v172
    %v269 = vpop.f32.mrb[0].mxu0
    %v270 = vadd.f32 %v196, %v269
    %v271 = vpop.f32.mrb[0].mxu0
    %272 = vdwg.mxu0
    %273 = vst [vmem:[%s6] sm:$0xff] %v265
    %274 = vst [vmem:[%s6 + $0x8] sm:$0xff] %v270
    // Predicated region
    $region34: #{rnn_model_step.1} parent=1 // pred_check
      _
    $region35: #{rnn_model_step.1} parent=1 // pred_check_branch
      %276 = sbr.rel (0) target = $region37
    $region36: #{rnn_model_step.1} parent=1 // pred_region
      _
    $region37: #{rnn_model_step.1} parent=1 // pred_fallthru
      _
    // Predicated region
    $region38: #{rnn_model_step.1} parent=1 // pred_check
      _
    $region39: #{rnn_model_step.1} parent=1 // pred_check_branch
      %278 = sbr.rel (0) target = $region41
    $region40: #{rnn_model_step.1} parent=1 // pred_region
      _
    $region41: #{rnn_model_step.1} parent=1 // pred_fallthru
      _
    // Predicated region
    $region42: #{rnn_model_step.1} parent=1 // pred_check
      _
    $region43: #{rnn_model_step.1} parent=1 // pred_check_branch
      %280 = sbr.rel (0) target = $region45
    $region44: #{rnn_model_step.1} parent=1 // pred_region
      _
    $region45: #{rnn_model_step.1} parent=1 // pred_fallthru
      _
    // Predicated region
    $region46: #{rnn_model_step.1} parent=1 // pred_check
      _
    $region47: #{rnn_model_step.1} parent=1 // pred_check_branch
      %282 = sbr.rel (0) target = $region49
    $region48: #{rnn_model_step.1} parent=1 // pred_region
      _
    $region49: #{rnn_model_step.1} parent=1 // pred_fallthru
      _
    %283 = vsyncpa [#allocation3], 1
    %284 = vsyncpa [#allocation5], 1

</llo_original>
